<compile_context>
chip_gen: v7x
topology: tpu7x:2x2x1
jax: 0.10.0
libtpu: 0.0.40
codegen_flags: <defaults>
</compile_context>

<pallas_src>
import functools

import jax
import jax.numpy as jnp
from jax.experimental import pallas as pl
from jax.experimental.pallas import tpu as pltpu


def _round_up(n, m):
    return ((n + m - 1) // m) * m


def _largest_divisor_leq(n, limit):
    for d in range(min(n, limit), 0, -1):
        if n % d == 0:
            return d
    return 1


def _vmem_budget_bytes():
    """Usable VMEM for this generation: capacity minus headroom."""
    try:
        cap = int(pltpu.get_tpu_info().vmem_capacity_bytes)
    except Exception:
        cap = 64 << 20            # conservative fallback (v7x-sized)
    return max(cap - max(8 << 20, cap // 8), 24 << 20)


def _channel_mix_kernel(x_ref, xts_ref, mk_ref, mr_ref,
                        wk_ref, wr_ref, wv_ref,
                        o_ref,
                        acc_ref, r_ref, xk_ref,
                        *, nr, crw):
    f = pl.program_id(1)
    nf = pl.num_programs(1)

    # ---- prologue (once per row tile): f32 key blend cached in matmul dtype ----
    @pl.when(f == 0)
    def _prologue():
        x = x_ref[...].astype(jnp.float32)
        x_ts = xts_ref[...].astype(jnp.float32)
        xk = x_ts + mk_ref[...].astype(jnp.float32) * (x - x_ts)
        xk_ref[...] = xk.astype(xk_ref.dtype)
        acc_ref[...] = jnp.zeros_like(acc_ref)

    # ---- key / value path for this F tile:  kv += relu(xk @ Wk_f)^2 @ Wv_f ----
    k = jnp.dot(xk_ref[...], wk_ref[...], preferred_element_type=jnp.float32)
    k = jnp.square(jnp.maximum(k, 0.0))
    acc_ref[...] += jnp.dot(k.astype(wv_ref.dtype), wv_ref[...],
                            preferred_element_type=jnp.float32)

    # ---- receptance: one (Cp, crw) column chunk of W_r per step, spread over
    #      the first nr f-steps.  The r-blend recompute is cheap VPU filler.
    @pl.when(f < nr)
    def _receptance_chunk():
        x = x_ref[...].astype(jnp.float32)
        x_ts = xts_ref[...].astype(jnp.float32)
        xr = x_ts + mr_ref[...].astype(jnp.float32) * (x - x_ts)
        rc = jnp.dot(xr.astype(wr_ref.dtype), wr_ref[...],
                     preferred_element_type=jnp.float32)
        r_ref[f] = jax.nn.sigmoid(rc)

    # ---- finalize (last F tile): gate kv with sigmoid(r) and store ----
    @pl.when(f == nf - 1)
    def _finalize():
        for j in range(nr):                         # static unroll; nr * crw == Cp
            cols = slice(j * crw, (j + 1) * crw)
            o_ref[:, cols] = (r_ref[j] * acc_ref[:, cols]).astype(o_ref.dtype)


def prepare_channel_mix_params(time_mix_k, time_mix_r, w_key, w_receptance, w_value):
    """Pad the parameters once (lane-dense), OUTSIDE the per-call forward.

    Layouts are input-major: w_key (C, F), w_receptance (C, C), w_value (F, C),
    i.e. the transpose of torch.nn.Linear's (out, in) weights."""
    C, F = w_key.shape
    Cp = _round_up(C, 128)
    Fp = _round_up(F, 128)

    def pad2(a, r, c):
        return jnp.pad(a, ((0, r - a.shape[0]), (0, c - a.shape[1])))

    return (pad2(jnp.reshape(time_mix_k, (1, C)), 1, Cp),
            pad2(jnp.reshape(time_mix_r, (1, C)), 1, Cp),
            pad2(w_key, Cp, Fp),
            pad2(w_receptance, Cp, Cp),
            pad2(w_value, Fp, Cp))


@jax.jit
def rwkv_channel_mix(x, params):
    """x: (B, T, C); params from prepare_channel_mix_params (padded)."""
    mk, mr, wk, wr, wv = params
    B, T, C = x.shape
    Cp, Fp = wk.shape
    rows = B * T
    act_b = x.dtype.itemsize
    w_b = wk.dtype.itemsize

    # --- tile selection against the per-generation VMEM budget ----------------
    budget = _vmem_budget_bytes()
    m = Cp // 128
    rows8 = _round_up(rows, 8)
    tm_cands = sorted({min(t, rows8) for t in
                       (1024, 768, 512, 384, 256, 128, 64, 32, 16, 8)}, reverse=True)
    tf_stream = [t for t in (4096, 2048, 1024, 512, 256, 128)
                 if t < Fp and Fp % t == 0]

    def footprint(tm, tf):
        nf = Fp // tf
        nr = _largest_divisor_leq(m, nf)            # W_r column chunks; nr*crw == Cp
        crw = Cp // nr
        blocks = (2 * 2 * tm * Cp * act_b           # x, x_ts (double-buffered)
                  + 2 * tm * Cp * act_b             # out
                  + 2 * 2 * Cp * act_b              # time-mix vectors
                  + 2 * Cp * tf * w_b               # W_key tile
                  + 2 * tf * Cp * w_b               # W_value tile
                  + 2 * Cp * crw * w_b)             # W_receptance chunk
        scratch = 2 * tm * Cp * 4 + tm * Cp * w_b   # kv acc + r chunks (f32), xk
        return blocks + scratch + (2 << 20), nr, crw

    tm = tf = nr = crw = None
    # Tier 1: whole FFN weight set VMEM-resident (tf == Fp) with the largest tm.
    for cand_tm in tm_cands:
        fp_est, cand_nr, cand_crw = footprint(cand_tm, Fp)
        if fp_est <= budget:
            tm, tf, nr, crw = cand_tm, Fp, cand_nr, cand_crw
            break
    # Tier 2: stream F tiles; still prefer the largest row tile (amortizes the
    # re-streamed W_key/W_value bytes -> arithmetic intensity ~ tm FLOP/byte).
    if tm is None:
        for cand_tm in tm_cands:
            for cand_tf in tf_stream:
                fp_est, cand_nr, cand_crw = footprint(cand_tm, cand_tf)
                if fp_est <= budget:
                    tm, tf, nr, crw = cand_tm, cand_tf, cand_nr, cand_crw
                    break
            if tm is not None:
                break
    if tm is None:                                  # last resort: smallest tiles
        tm = tm_cands[-1]
        tf = tf_stream[-1] if tf_stream else Fp
        fp_est, nr, crw = footprint(tm, tf)

    rows_p = _round_up(rows, tm)
    nf = Fp // tf

    # --- per-call activation prep (time shift is per-sequence, so in-wrapper) --
    x_ts = jnp.pad(x[:, :-1, :], ((0, 0), (1, 0), (0, 0)))

    def pad_act(a):
        a = a.reshape(rows, C)
        return jnp.pad(a, ((0, rows_p - rows), (0, Cp - C)))

    x2, xts2 = pad_act(x), pad_act(x_ts)

    cost = pl.CostEstimate(
        flops=int(4 * rows * C * Fp + 2 * rows * C * C),
        transcendentals=int(rows * C),
        bytes_accessed=int((2 * Cp * Fp + Cp * Cp) * w_b + 3 * rows * C * act_b),
    )

    if nr == nf:
        wr_index = lambda i, f: (0, f)
    else:
        wr_index = lambda i, f: (0, jnp.minimum(f, nr - 1))  # pinned after chunk nr-1

    kernel = functools.partial(_channel_mix_kernel, nr=nr, crw=crw)

    out = pl.pallas_call(
        kernel,
        out_shape=jax.ShapeDtypeStruct((rows_p, Cp), x.dtype),
        grid_spec=pltpu.PrefetchScalarGridSpec(
            num_scalar_prefetch=0,
            grid=(rows_p // tm, nf),
            in_specs=[
                pl.BlockSpec((tm, Cp), lambda i, f: (i, 0)),     # x rows
                pl.BlockSpec((tm, Cp), lambda i, f: (i, 0)),     # time-shifted x
                pl.BlockSpec((1, Cp), lambda i, f: (0, 0)),      # time_mix_k
                pl.BlockSpec((1, Cp), lambda i, f: (0, 0)),      # time_mix_r
                pl.BlockSpec((Cp, tf), lambda i, f: (0, f)),     # W_key F-tile
                pl.BlockSpec((Cp, crw), wr_index),               # W_receptance chunk
                pl.BlockSpec((tf, Cp), lambda i, f: (f, 0)),     # W_value F-tile
            ],
            out_specs=pl.BlockSpec((tm, Cp), lambda i, f: (i, 0)),
            scratch_shapes=[
                pltpu.VMEM((tm, Cp), jnp.float32),        # kv accumulator
                pltpu.VMEM((nr, tm, crw), jnp.float32),   # sigmoid(r) chunks
                pltpu.VMEM((tm, Cp), wk.dtype),           # cached key-path blend
            ],
        ),
        compiler_params=pltpu.CompilerParams(
            dimension_semantics=("parallel", "arbitrary"),
            vmem_limit_bytes=int(budget),
        ),
        cost_estimate=cost,
    )(x2, xts2, mk, mr, wk, wr, wv)

    return out[:rows, :C].reshape(B, T, C)


def _xavier_uniform(key, out_features, in_features, dtype=jnp.float32):
    # matches torch.nn.init.xavier_uniform_ on a (out, in) Linear weight
    bound = (6.0 / (in_features + out_features)) ** 0.5
    return jax.random.uniform(
        key, (out_features, in_features), dtype=dtype, minval=-bound, maxval=bound)


def reference_forward(x, mk, mr, wk_t, wr_t, wv_t):
    """Pure-JAX reference mirroring the PyTorch module (f32)."""
    x_ts = jnp.pad(x[:, :-1, :], ((0, 0), (1, 0), (0, 0)))
    xk = x * mk[None] + x_ts * (1.0 - mk[None])
    xr = x * mr[None] + x_ts * (1.0 - mr[None])
    k = jnp.square(jnp.maximum(xk @ wk_t, 0.0))
    kv = k @ wv_t
    return jax.nn.sigmoid(xr @ wr_t) * kv


if __name__ == "__main__":
    # config: n_embd=32, dim_ffn=64; input (B=2, T=8, C=32)
    B, T, C, F = 2, 8, 32, 64

    root = jax.random.PRNGKey(0)
    k_x, k_mk, k_mr, k_key, k_rec, k_val = jax.random.split(root, 6)

    x = jax.random.normal(k_x, (B, T, C), dtype=jnp.float32)

    time_mix_k = 0.02 * jax.random.normal(k_mk, (1, C), dtype=jnp.float32)
    time_mix_r = 0.02 * jax.random.normal(k_mr, (1, C), dtype=jnp.float32)

    # PyTorch Linear weights are (out, in); transpose to (in, out) for the kernel.
    w_key = _xavier_uniform(k_key, F, C).T          # (C, F)
    w_receptance = _xavier_uniform(k_rec, C, C).T   # (C, C)
    w_value = _xavier_uniform(k_val, C, F).T        # (F, C)

    # f32 run: exact-path correctness check vs pure-JAX reference.
    params = prepare_channel_mix_params(time_mix_k, time_mix_r,
                                        w_key, w_receptance, w_value)
    out = jax.block_until_ready(rwkv_channel_mix(x, params))
    ref = reference_forward(x, time_mix_k, time_mix_r,
                            w_key, w_receptance, w_value)
    assert out.shape == (B, T, C)
    assert jnp.allclose(out, ref, atol=1e-4, rtol=1e-4), "f32 mismatch vs reference"

    # bf16 run: exercises the fast bf16-MXU path (bf16 weights/activations,
    # f32 blends and accumulation), compared loosely against an f32 reference
    # built from the same bf16-rounded parameters.
    to_bf = lambda a: a.astype(jnp.bfloat16)
    params_bf = prepare_channel_mix_params(
        to_bf(time_mix_k), to_bf(time_mix_r),
        to_bf(w_key), to_bf(w_receptance), to_bf(w_value))
    out_bf = jax.block_until_ready(rwkv_channel_mix(to_bf(x), params_bf))
    ref_bf = reference_forward(
        to_bf(x).astype(jnp.float32),
        to_bf(time_mix_k).astype(jnp.float32), to_bf(time_mix_r).astype(jnp.float32),
        to_bf(w_key).astype(jnp.float32), to_bf(w_receptance).astype(jnp.float32),
        to_bf(w_value).astype(jnp.float32))
    assert out_bf.shape == (B, T, C)
    assert jnp.allclose(out_bf.astype(jnp.float32), ref_bf, atol=0.2, rtol=0.05), \
        "bf16 mismatch vs reference"

    print("KERNEL_OK")
</pallas_src>

<mosaic_0001>
module attributes {stable_mosaic.version = 11 : i64} {
  func.func @_channel_mix_kernel(%arg0: i32, %arg1: i32, %arg2: memref<16x128xf32, #tpu.memory_space<vmem>>, %arg3: memref<16x128xf32, #tpu.memory_space<vmem>>, %arg4: memref<1x128xf32, #tpu.memory_space<vmem>>, %arg5: memref<1x128xf32, #tpu.memory_space<vmem>>, %arg6: memref<128x128xf32, #tpu.memory_space<vmem>>, %arg7: memref<128x128xf32, #tpu.memory_space<vmem>>, %arg8: memref<128x128xf32, #tpu.memory_space<vmem>>, %arg9: memref<16x128xf32, #tpu.memory_space<vmem>>, %arg10: memref<16x128xf32, #tpu.memory_space<vmem>>, %arg11: memref<1x16x128xf32, #tpu.memory_space<vmem>>, %arg12: memref<16x128xf32, #tpu.memory_space<vmem>>) attributes {dimension_semantics = [#tpu.dimension_semantics<parallel>, #tpu.dimension_semantics<arbitrary>], iteration_bounds = array<i64: 1, 1>, scalar_prefetch = 0 : i64, scratch_operands = 3 : i64, tpu.core_type = #tpu.core_type<tc>, window_params = [{transform_indices = @transform_0, window_bounds = array<i64: 16, 128>}, {transform_indices = @transform_1, window_bounds = array<i64: 16, 128>}, {pipeline_mode = #tpu.pipeline_mode<synchronous>, transform_indices = @transform_2, window_bounds = array<i64: 1, 128>}, {pipeline_mode = #tpu.pipeline_mode<synchronous>, transform_indices = @transform_3, window_bounds = array<i64: 1, 128>}, {transform_indices = @transform_4, window_bounds = array<i64: 128, 128>}, {transform_indices = @transform_5, window_bounds = array<i64: 128, 128>}, {transform_indices = @transform_6, window_bounds = array<i64: 128, 128>}, {transform_indices = @transform_7, window_bounds = array<i64: 16, 128>}]} {
    %c0_i32 = arith.constant 0 : i32
    %0 = arith.cmpi eq, %arg1, %c0_i32 : i32
    %1 = arith.extui %0 : i1 to i32
    %c0_i32_0 = arith.constant 0 : i32
    %2 = arith.cmpi ne, %1, %c0_i32_0 : i32
    scf.if %2 {
      %c0_15 = arith.constant 0 : index
      %c0_16 = arith.constant 0 : index
      %20 = vector.load %arg2[%c0_15, %c0_16] : memref<16x128xf32, #tpu.memory_space<vmem>>, vector<16x128xf32>
      %c0_17 = arith.constant 0 : index
      %c0_18 = arith.constant 0 : index
      %21 = vector.load %arg3[%c0_17, %c0_18] : memref<16x128xf32, #tpu.memory_space<vmem>>, vector<16x128xf32>
      %c0_19 = arith.constant 0 : index
      %c0_20 = arith.constant 0 : index
      %22 = vector.load %arg4[%c0_19, %c0_20] : memref<1x128xf32, #tpu.memory_space<vmem>>, vector<1x128xf32>
      %23 = arith.subf %20, %21 : vector<16x128xf32>
      %24 = vector.broadcast %22 : vector<1x128xf32> to vector<16x128xf32>
      %25 = arith.mulf %24, %23 : vector<16x128xf32>
      %26 = arith.addf %21, %25 : vector<16x128xf32>
      %c0_21 = arith.constant 0 : index
      %c0_22 = arith.constant 0 : index
      %27 = vector.load %arg12[%c0_21, %c0_22] : memref<16x128xf32, #tpu.memory_space<vmem>>, vector<16x128xf32>
      tpu.vector_store %arg12[%c0_21, %c0_22], %26 {strides = array<i32>} : memref<16x128xf32, #tpu.memory_space<vmem>>, vector<16x128xf32>,
      %cst_23 = arith.constant 0.000000e+00 : f32
      %28 = vector.broadcast %cst_23 : f32 to vector<16x128xf32>
      %c0_24 = arith.constant 0 : index
      %c0_25 = arith.constant 0 : index
      %29 = vector.load %arg10[%c0_24, %c0_25] : memref<16x128xf32, #tpu.memory_space<vmem>>, vector<16x128xf32>
      tpu.vector_store %arg10[%c0_24, %c0_25], %28 {strides = array<i32>} : memref<16x128xf32, #tpu.memory_space<vmem>>, vector<16x128xf32>,
    } else {
    }
    %c0 = arith.constant 0 : index
    %c0_1 = arith.constant 0 : index
    %3 = vector.load %arg12[%c0, %c0_1] : memref<16x128xf32, #tpu.memory_space<vmem>>, vector<16x128xf32>
    %c0_2 = arith.constant 0 : index
    %c0_3 = arith.constant 0 : index
    %4 = vector.load %arg6[%c0_2, %c0_3] : memref<128x128xf32, #tpu.memory_space<vmem>>, vector<128x128xf32>
    %cst = arith.constant dense<0.000000e+00> : vector<16x128xf32>
    %5 = tpu.matmul %3, %4, %cst {dimension_numbers = #tpu.dot_dimension_numbers<[1], [0], [0], [1], [0, 0, 1, 1], [], []>} : vector<16x128xf32>, vector<128x128xf32>, vector<16x128xf32> -> vector<16x128xf32>
    %cst_4 = arith.constant 0.000000e+00 : f32
    %6 = vector.broadcast %cst_4 : f32 to vector<16x128xf32>
    %7 = arith.maximumf %5, %6 : vector<16x128xf32>
    %8 = arith.mulf %7, %7 : vector<16x128xf32>
    %c0_5 = arith.constant 0 : index
    %c0_6 = arith.constant 0 : index
    %9 = vector.load %arg10[%c0_5, %c0_6] : memref<16x128xf32, #tpu.memory_space<vmem>>, vector<16x128xf32>
    %c0_7 = arith.constant 0 : index
    %c0_8 = arith.constant 0 : index
    %10 = vector.load %arg8[%c0_7, %c0_8] : memref<128x128xf32, #tpu.memory_space<vmem>>, vector<128x128xf32>
    %cst_9 = arith.constant dense<0.000000e+00> : vector<16x128xf32>
    %11 = tpu.matmul %8, %10, %cst_9 {dimension_numbers = #tpu.dot_dimension_numbers<[1], [0], [0], [1], [0, 0, 1, 1], [], []>} : vector<16x128xf32>, vector<128x128xf32>, vector<16x128xf32> -> vector<16x128xf32>
    %12 = arith.addf %9, %11 : vector<16x128xf32>
    %c0_10 = arith.constant 0 : index
    %c0_11 = arith.constant 0 : index
    %13 = vector.load %arg10[%c0_10, %c0_11] : memref<16x128xf32, #tpu.memory_space<vmem>>, vector<16x128xf32>
    tpu.vector_store %arg10[%c0_10, %c0_11], %12 {strides = array<i32>} : memref<16x128xf32, #tpu.memory_space<vmem>>, vector<16x128xf32>,
    %c1_i32 = arith.constant 1 : i32
    %14 = arith.cmpi slt, %arg1, %c1_i32 : i32
    %15 = arith.extui %14 : i1 to i32
    %c0_i32_12 = arith.constant 0 : i32
    %16 = arith.cmpi ne, %15, %c0_i32_12 : i32
    scf.if %16 {
      %c0_15 = arith.constant 0 : index
      %c0_16 = arith.constant 0 : index
      %20 = vector.load %arg2[%c0_15, %c0_16] : memref<16x128xf32, #tpu.memory_space<vmem>>, vector<16x128xf32>
      %c0_17 = arith.constant 0 : index
      %c0_18 = arith.constant 0 : index
      %21 = vector.load %arg3[%c0_17, %c0_18] : memref<16x128xf32, #tpu.memory_space<vmem>>, vector<16x128xf32>
      %c0_19 = arith.constant 0 : index
      %c0_20 = arith.constant 0 : index
      %22 = vector.load %arg5[%c0_19, %c0_20] : memref<1x128xf32, #tpu.memory_space<vmem>>, vector<1x128xf32>
      %23 = arith.subf %20, %21 : vector<16x128xf32>
      %24 = vector.broadcast %22 : vector<1x128xf32> to vector<16x128xf32>
      %25 = arith.mulf %24, %23 : vector<16x128xf32>
      %26 = arith.addf %21, %25 : vector<16x128xf32>
      %c0_21 = arith.constant 0 : index
      %c0_22 = arith.constant 0 : index
      %27 = vector.load %arg7[%c0_21, %c0_22] : memref<128x128xf32, #tpu.memory_space<vmem>>, vector<128x128xf32>
      %cst_23 = arith.constant dense<0.000000e+00> : vector<16x128xf32>
      %28 = tpu.matmul %26, %27, %cst_23 {dimension_numbers = #tpu.dot_dimension_numbers<[1], [0], [0], [1], [0, 0, 1, 1], [], []>} : vector<16x128xf32>, vector<128x128xf32>, vector<16x128xf32> -> vector<16x128xf32>
      %29 = arith.negf %28 : vector<16x128xf32>
      %30 = math.exp %29 : vector<16x128xf32>
      %cst_24 = arith.constant 1.000000e+00 : f32
      %31 = vector.broadcast %cst_24 : f32 to vector<16x128xf32>
      %32 = arith.addf %31, %30 : vector<16x128xf32>
      %33 = arith.divf %31, %32 : vector<16x128xf32>
      %34 = arith.index_cast %arg1 : i32 to index
      %c0_25 = arith.constant 0 : index
      %c0_26 = arith.constant 0 : index
      %35 = vector.load %arg11[%34, %c0_25, %c0_26] : memref<1x16x128xf32, #tpu.memory_space<vmem>>, vector<1x16x128xf32>
      %36 = vector.shape_cast %35 : vector<1x16x128xf32> to vector<16x128xf32>
      %37 = vector.shape_cast %33 : vector<16x128xf32> to vector<1x16x128xf32>
      tpu.vector_store %arg11[%34, %c0_25, %c0_26], %37 {strides = array<i32>} : memref<1x16x128xf32, #tpu.memory_space<vmem>>, vector<1x16x128xf32>,
    } else {
    }
    %c0_i32_13 = arith.constant 0 : i32
    %17 = arith.cmpi eq, %arg1, %c0_i32_13 : i32
    %18 = arith.extui %17 : i1 to i32
    %c0_i32_14 = arith.constant 0 : i32
    %19 = arith.cmpi ne, %18, %c0_i32_14 : i32
    scf.if %19 {
      %c0_15 = arith.constant 0 : index
      %c0_16 = arith.constant 0 : index
      %c0_17 = arith.constant 0 : index
      %20 = vector.load %arg11[%c0_15, %c0_16, %c0_17] : memref<1x16x128xf32, #tpu.memory_space<vmem>>, vector<1x16x128xf32>
      %21 = vector.shape_cast %20 : vector<1x16x128xf32> to vector<16x128xf32>
      %c0_18 = arith.constant 0 : index
      %c0_19 = arith.constant 0 : index
      %22 = vector.load %arg10[%c0_18, %c0_19] : memref<16x128xf32, #tpu.memory_space<vmem>>, vector<16x128xf32>
      %23 = arith.mulf %21, %22 : vector<16x128xf32>
      %c0_20 = arith.constant 0 : index
      %c0_21 = arith.constant 0 : index
      %24 = vector.load %arg9[%c0_20, %c0_21] : memref<16x128xf32, #tpu.memory_space<vmem>>, vector<16x128xf32>
      tpu.vector_store %arg9[%c0_20, %c0_21], %23 {strides = array<i32>} : memref<16x128xf32, #tpu.memory_space<vmem>>, vector<16x128xf32>,
    } else {
    }
    return
  }
  func.func @transform_0(%arg0: i32, %arg1: i32) -> (i32, i32) {
    %c0_i32 = arith.constant 0 : i32
    %c0_i32_0 = arith.constant 0 : i32
    return %arg0, %c0_i32 : i32, i32
  }
  func.func @transform_1(%arg0: i32, %arg1: i32) -> (i32, i32) {
    %c0_i32 = arith.constant 0 : i32
    %c0_i32_0 = arith.constant 0 : i32
    return %arg0, %c0_i32 : i32, i32
  }
  func.func @transform_2(%arg0: i32, %arg1: i32) -> (i32, i32) {
    %c0_i32 = arith.constant 0 : i32
    %c0_i32_0 = arith.constant 0 : i32
    %c0_i32_1 = arith.constant 0 : i32
    return %c0_i32, %c0_i32_0 : i32, i32
  }
  func.func @transform_3(%arg0: i32, %arg1: i32) -> (i32, i32) {
    %c0_i32 = arith.constant 0 : i32
    %c0_i32_0 = arith.constant 0 : i32
    %c0_i32_1 = arith.constant 0 : i32
    return %c0_i32, %c0_i32_0 : i32, i32
  }
  func.func @transform_4(%arg0: i32, %arg1: i32) -> (i32, i32) {
    %c0_i32 = arith.constant 0 : i32
    %c0_i32_0 = arith.constant 0 : i32
    return %c0_i32, %arg1 : i32, i32
  }
  func.func @transform_5(%arg0: i32, %arg1: i32) -> (i32, i32) {
    %c0_i32 = arith.constant 0 : i32
    %c0_i32_0 = arith.constant 0 : i32
    return %c0_i32, %arg1 : i32, i32
  }
  func.func @transform_6(%arg0: i32, %arg1: i32) -> (i32, i32) {
    %c0_i32 = arith.constant 0 : i32
    %c0_i32_0 = arith.constant 0 : i32
    return %arg1, %c0_i32 : i32, i32
  }
  func.func @transform_7(%arg0: i32, %arg1: i32) -> (i32, i32) {
    %c0_i32 = arith.constant 0 : i32
    %c0_i32_0 = arith.constant 0 : i32
    return %arg0, %c0_i32 : i32, i32
  }
}

</mosaic_0001>

<llo_original>
// kernel: rwkv_channel_mix.1
$region0: #{rwkv_channel_mix.1}
  #allocation0 [shape = 'u32[]', space=smem, size = 0x4, offset = 0x4, fixed_abs, tag = 'smem constant byte address 0x4 - core index']
  #allocation1 [shape = 'u32[144,128]{1,0:T(1,128)}', space=vmem, size = 0x12000, scoped, tag = 'internal scratch']
  #allocation2 [shape = 'f32[16,128]{1,0:T(8,128)}', space=vmem, size = 0x2000, scoped, tag = 'scratch operand']
  #allocation3 [shape = 'f32[1,16,128]{2,1,0:T(8,128)}', space=vmem, size = 0x2000, scoped, tag = 'scratch operand']
  #allocation4 [shape = 'f32[16,128]{1,0:T(8,128)}', space=vmem, size = 0x2000, scoped, tag = 'scratch operand']
  %s0 = inlined_call_operand.vmem [shape: f32[16,128], index: 0, kind: input, shape index: {}]
  %s1 = inlined_call_operand.vmem [shape: f32[16,128], index: 1, kind: input, shape index: {}]
  %s2 = inlined_call_operand.vmem [shape: f32[1,128], index: 2, kind: input, shape index: {}]
  %s3 = inlined_call_operand.vmem [shape: f32[1,128], index: 3, kind: input, shape index: {}]
  %s4 = inlined_call_operand.hbm [shape: f32[128,128], index: 4, kind: input, shape index: {}]
  %s5 = inlined_call_operand.hbm [shape: f32[128,128], index: 5, kind: input, shape index: {}]
  %s6 = inlined_call_operand.hbm [shape: f32[128,128], index: 6, kind: input, shape index: {}]
  %s7 = inlined_call_operand.vmem [shape: f32[16,128], index: 7, kind: output, shape index: {}]
  %s8 = sld [smem:[#allocation0]]
  $region62: #{rwkv_channel_mix.1} parent=0
    _
  %s10 = ssub.s32 1, %s8
  %s11 = scalar_select 0, %s10, %s8
  $region1: #{rwkv_channel_mix.1} parent=0
    #allocation5 [shape = 'u8[65536]{0}', space=vmem, size = 0x10000, scoped, tag = 'input window, operand 4, single buffered']
    #allocation6 [shape = 's32[1]{0}', space=sflag, size = 0x4, scoped, tag = 'scoped memory for rwkv_channel_mix.1']
    #allocation7 [shape = 'u8[65536]{0}', space=vmem, size = 0x10000, scoped, tag = 'input window, operand 5, single buffered']
    #allocation8 [shape = 's32[1]{0}', space=sflag, size = 0x4, scoped, tag = 'scoped memory for rwkv_channel_mix.1']
    #allocation9 [shape = 'u8[65536]{0}', space=vmem, size = 0x10000, scoped, tag = 'input window, operand 6, single buffered']
    %12 = vsyncpa [#allocation6], 0
    %13 = vsyncpa [#allocation8], 0
    // Predicated region
    $region2: #{rwkv_channel_mix.1} parent=1 // pred_check
      _
    $region3: #{rwkv_channel_mix.1} parent=1 // pred_check_branch
      %15 = sbr.rel (0) target = $region5
    $region4: #{rwkv_channel_mix.1} parent=1 // pred_region
      _
    $region5: #{rwkv_channel_mix.1} parent=1 // pred_fallthru
      _
    // Predicated region
    $region6: #{rwkv_channel_mix.1} parent=1 // pred_check
      _
    $region7: #{rwkv_channel_mix.1} parent=1 // pred_check_branch
      %17 = sbr.rel (0) target = $region9
    $region8: #{rwkv_channel_mix.1} parent=1 // pred_region
      _
    $region9: #{rwkv_channel_mix.1} parent=1 // pred_fallthru
      _
    // Predicated region
    $region10: #{rwkv_channel_mix.1} parent=1 // pred_check
      _
    $region11: #{rwkv_channel_mix.1} parent=1 // pred_check_branch
      %19 = sbr.rel (0) target = $region13
    $region12: #{rwkv_channel_mix.1} parent=1 // pred_region
      _
    $region13: #{rwkv_channel_mix.1} parent=1 // pred_fallthru
      _
    // Predicated region
    $region14: #{rwkv_channel_mix.1} parent=1 // pred_check
      _
    $region15: #{rwkv_channel_mix.1} parent=1 // pred_check_branch
      %21 = sbr.rel (0) target = $region17
    $region16: #{rwkv_channel_mix.1} parent=1 // pred_region
      _
    $region17: #{rwkv_channel_mix.1} parent=1 // pred_fallthru
      _
    // Predicated region
    $region18: #{rwkv_channel_mix.1} parent=1 // pred_check
      _
    $region19: #{rwkv_channel_mix.1} parent=1 // pred_check_branch
      %23 = sbr.rel (0) target = $region21
    $region20: #{rwkv_channel_mix.1} parent=1 // pred_region
      %s25 = ssub.s32 2048, 2048
      %26 = vsyncadd [#allocation6], %s25
      %s27 = sshll.u32 [#allocation5], 4
      %s28 = int_to_ptr.vmem [resolvable:$true] %s27
      %33 = dma.hbm_to_vmem [thread:$0]  %s4, 2048, %s28, [#allocation6], 128, 128, 8
    $region21: #{rwkv_channel_mix.1} parent=1 // pred_fallthru
      _
    // Predicated region
    $region22: #{rwkv_channel_mix.1} parent=1 // pred_check
      _
    $region23: #{rwkv_channel_mix.1} parent=1 // pred_check_branch
      %35 = sbr.rel (0) target = $region25
    $region24: #{rwkv_channel_mix.1} parent=1 // pred_region
      %s37 = ssub.s32 2048, 2048
      %38 = vsyncadd [#allocation8], %s37
      %s39 = sshll.u32 [#allocation7], 4
      %s40 = int_to_ptr.vmem [resolvable:$true] %s39
      %45 = dma.hbm_to_vmem [thread:$0]  %s5, 2048, %s40, [#allocation8], 128, 128, 8
    $region25: #{rwkv_channel_mix.1} parent=1 // pred_fallthru
      _
    // Predicated region
    $region26: #{rwkv_channel_mix.1} parent=1 // pred_check
      _
    $region27: #{rwkv_channel_mix.1} parent=1 // pred_check_branch
      %47 = sbr.rel (0) target = $region29
    $region28: #{rwkv_channel_mix.1} parent=1 // pred_region
      %s49 = ssub.s32 2048, 2048
      %50 = vsyncadd [#allocation8], %s49
      %s51 = sshll.u32 [#allocation9], 4
      %s52 = int_to_ptr.vmem [resolvable:$true] %s51
      %57 = dma.hbm_to_vmem [thread:$0]  %s6, 2048, %s52, [#allocation8], 128, 128, 8
    $region29: #{rwkv_channel_mix.1} parent=1 // pred_fallthru
      _
    // Predicated region
    $region30: #{rwkv_channel_mix.1} parent=1 // pred_check
      _
    $region31: #{rwkv_channel_mix.1} parent=1 // pred_check_branch
      %59 = sbr.rel (0) target = $region33
    $region32: #{rwkv_channel_mix.1} parent=1 // pred_region
      %60 = dma.done [#allocation6], 2048
    $region33: #{rwkv_channel_mix.1} parent=1 // pred_fallthru
      _
    // Predicated region
    $region34: #{rwkv_channel_mix.1} parent=1 // pred_check
      _
    $region35: #{rwkv_channel_mix.1} parent=1 // pred_check_branch
      %62 = sbr.rel (0) target = $region37
    $region36: #{rwkv_channel_mix.1} parent=1 // pred_region
      %63 = dma.done [#allocation8], 2048
    $region37: #{rwkv_channel_mix.1} parent=1 // pred_fallthru
      _
    // Predicated region
    $region38: #{rwkv_channel_mix.1} parent=1 // pred_check
      _
    $region39: #{rwkv_channel_mix.1} parent=1 // pred_check_branch
      %65 = sbr.rel (0) target = $region41
    $region40: #{rwkv_channel_mix.1} parent=1 // pred_region
      %66 = dma.done [#allocation8], 2048
    $region41: #{rwkv_channel_mix.1} parent=1 // pred_fallthru
      _
    %p67 = scmp.eq.s32.totalorder 0, 0
    // Predicated region
    $region42: #{rwkv_channel_mix.1} parent=1 // pred_check
      %p68 = pneg %p67
    $region43: #{rwkv_channel_mix.1} parent=1 // pred_check_branch
      %70 = sbr.rel (%p68) target = $region45
    $region44: #{rwkv_channel_mix.1} parent=1 // pred_region
      %v71 = vld [vmem:[%s0] sm:$0xff]
      %v72 = vld [vmem:[%s0 + $0x8] sm:$0xff]
      %v73 = vld [vmem:[%s1] sm:$0xff]
      %v74 = vld [vmem:[%s1 + $0x8] sm:$0xff]
      %v75 = vld [vmem:[%s2] sm:$0x1]
      %v76 = vsub.f32 %v71, %v73
      %v77 = vsub.f32 %v72, %v74
      %v79 = vlaneseq
      %v80 = vshrl.u32 %v79, 7
      %v81 = vsub.s32 0, %v80
      %v82 = vrot.slane %v75, %v81
      %v84 = vmul.f32 %v82, %v76
      %v85 = vmul.f32 %v82, %v77
      %v86 = vadd.f32 %v73, %v84
      %v87 = vadd.f32 %v74, %v85
      %88 = vst [vmem:[#allocation4] sm:$0xff] %v86
      %89 = vst [vmem:[#allocation4 + $0x8] sm:$0xff] %v87
      %90 = vst [vmem:[#allocation2] sm:$0xff] 0.0
      %91 = vst [vmem:[#allocation2 + $0x8] sm:$0xff] 0.0
    $region45: #{rwkv_channel_mix.1} parent=1 // pred_fallthru
      _
    %v92 = vld [vmem:[#allocation4] sm:$0xff]
    %v93 = vld [vmem:[#allocation4 + $0x8] sm:$0xff]
    %v94 = vld [vmem:[#allocation5] sm:$0xff]
    %v95 = vld [vmem:[#allocation5 + $0x8] sm:$0xff]
    %v96 = vld [vmem:[#allocation5 + $0x10] sm:$0xff]
    %v97 = vld [vmem:[#allocation5 + $0x18] sm:$0xff]
    %v98 = vld [vmem:[#allocation5 + $0x20] sm:$0xff]
    %v99 = vld [vmem:[#allocation5 + $0x28] sm:$0xff]
    %v100 = vld [vmem:[#allocation5 + $0x30] sm:$0xff]
    %v101 = vld [vmem:[#allocation5 + $0x38] sm:$0xff]
    %v102 = vld [vmem:[#allocation5 + $0x40] sm:$0xff]
    %v103 = vld [vmem:[#allocation5 + $0x48] sm:$0xff]
    %v104 = vld [vmem:[#allocation5 + $0x50] sm:$0xff]
    %v105 = vld [vmem:[#allocation5 + $0x58] sm:$0xff]
    %v106 = vld [vmem:[#allocation5 + $0x60] sm:$0xff]
    %v107 = vld [vmem:[#allocation5 + $0x68] sm:$0xff]
    %v108 = vld [vmem:[#allocation5 + $0x70] sm:$0xff]
    %v109 = vld [vmem:[#allocation5 + $0x78] sm:$0xff]
    %110 = vmatprep.subr.mxu0 0.0
    %111 = vmatpush1.msra.mxu0 %v94
    %112 = vmatprep.subr.mxu0 0.0
    %113 = vmatpush1.msra.mxu0 %v95
    %114 = vmatprep.subr.mxu0 0.0
    %115 = vmatpush1.msra.mxu0 %v96
    %116 = vmatprep.subr.mxu0 0.0
    %117 = vmatpush1.msra.mxu0 %v97
    %118 = vmatprep.subr.mxu0 0.0
    %119 = vmatpush1.msra.mxu0 %v98
    %120 = vmatprep.subr.mxu0 0.0
    %121 = vmatpush1.msra.mxu0 %v99
    %122 = vmatprep.subr.mxu0 0.0
    %123 = vmatpush1.msra.mxu0 %v100
    %124 = vmatprep.subr.mxu0 0.0
    %125 = vmatpush1.msra.mxu0 %v101
    %126 = vmatprep.subr.mxu0 0.0
    %127 = vmatpush1.msra.mxu0 %v102
    %128 = vmatprep.subr.mxu0 0.0
    %129 = vmatpush1.msra.mxu0 %v103
    %130 = vmatprep.subr.mxu0 0.0
    %131 = vmatpush1.msra.mxu0 %v104
    %132 = vmatprep.subr.mxu0 0.0
    %133 = vmatpush1.msra.mxu0 %v105
    %134 = vmatprep.subr.mxu0 0.0
    %135 = vmatpush1.msra.mxu0 %v106
    %136 = vmatprep.subr.mxu0 0.0
    %137 = vmatpush1.msra.mxu0 %v107
    %138 = vmatprep.subr.mxu0 0.0
    %139 = vmatpush1.msra.mxu0 %v108
    %140 = vmatprep.subr.mxu0 0.0
    %141 = vmatpush1.msra.mxu0 %v109
    %142 = vmatprep.subr.mxu0 0.0
    %143 = vmatpush1.msra.mxu0 0.0
    %144 = vmatprep.subr.mxu0 0.0
    %145 = vmatpush1.msra.mxu0 0.0
    %146 = vmatprep.subr.mxu0 0.0
    %147 = vmatpush1.msra.mxu0 0.0
    %148 = vmatprep.subr.mxu0 0.0
    %149 = vmatpush1.msra.mxu0 0.0
    %150 = vmatprep.subr.mxu0 0.0
    %151 = vmatpush1.msra.mxu0 0.0
    %152 = vmatprep.subr.mxu0 0.0
    %153 = vmatpush1.msra.mxu0 0.0
    %154 = vmatprep.subr.mxu0 0.0
    %155 = vmatpush1.msra.mxu0 0.0
    %156 = vmatprep.subr.mxu0 0.0
    %157 = vmatpush1.msra.mxu0 0.0
    %158 = vmatprep.subr.mxu0 0.0
    %159 = vmatpush1.msra.mxu0 0.0
    %160 = vmatprep.subr.mxu0 0.0
    %161 = vmatpush1.msra.mxu0 0.0
    %162 = vmatprep.subr.mxu0 0.0
    %163 = vmatpush1.msra.mxu0 0.0
    %164 = vmatprep.subr.mxu0 0.0
    %165 = vmatpush1.msra.mxu0 0.0
    %166 = vmatprep.subr.mxu0 0.0
    %167 = vmatpush1.msra.mxu0 0.0
    %168 = vmatprep.subr.mxu0 0.0
    %169 = vmatpush1.msra.mxu0 0.0
    %170 = vmatprep.subr.mxu0 0.0
    %171 = vmatpush1.msra.mxu0 0.0
    %172 = vmatprep.subr.mxu0 0.0
    %173 = vmatpush1.msra.mxu0 0.0
    %174 = vmatprep.mubr.f32.mxu0 0.0
    %175 = vmatmul.mubr.f32.gmra.mrb[0].mxu0 %v92
    %v176 = vpop.f32.mrb[0].mxu0
    %v177 = vadd.f32 0.0, %v176
    %v178 = vpop.f32.mrb[0].mxu0
    %179 = vmatprep.mubr.f32.mxu0 0.0
    %180 = vmatmul.mubr.f32.gmra.mrb[0].mxu0 %v93
    %v181 = vpop.f32.mrb[0].mxu0
    %v182 = vadd.f32 0.0, %v181
    %v183 = vpop.f32.mrb[0].mxu0
    %184 = vdwg.mxu0
    %v185 = vmax.f32 %v177, 0.0
    %v186 = vmax.f32 %v182, 0.0
    %v187 = vmul.f32 %v185, %v185
    %v188 = vmul.f32 %v186, %v186
    %v189 = vld [vmem:[#allocation2] sm:$0xff]
    %v190 = vld [vmem:[#allocation2 + $0x8] sm:$0xff]
    %v191 = vld [vmem:[#allocation9] sm:$0xff]
    %v192 = vld [vmem:[#allocation9 + $0x8] sm:$0xff]
    %v193 = vld [vmem:[#allocation9 + $0x10] sm:$0xff]
    %v194 = vld [vmem:[#allocation9 + $0x18] sm:$0xff]
    %v195 = vld [vmem:[#allocation9 + $0x20] sm:$0xff]
    %v196 = vld [vmem:[#allocation9 + $0x28] sm:$0xff]
    %v197 = vld [vmem:[#allocation9 + $0x30] sm:$0xff]
    %v198 = vld [vmem:[#allocation9 + $0x38] sm:$0xff]
    %v199 = vld [vmem:[#allocation9 + $0x40] sm:$0xff]
    %v200 = vld [vmem:[#allocation9 + $0x48] sm:$0xff]
    %v201 = vld [vmem:[#allocation9 + $0x50] sm:$0xff]
    %v202 = vld [vmem:[#allocation9 + $0x58] sm:$0xff]
    %v203 = vld [vmem:[#allocation9 + $0x60] sm:$0xff]
    %v204 = vld [vmem:[#allocation9 + $0x68] sm:$0xff]
    %v205 = vld [vmem:[#allocation9 + $0x70] sm:$0xff]
    %v206 = vld [vmem:[#allocation9 + $0x78] sm:$0xff]
    %207 = vmatprep.subr.mxu0 0.0
    %208 = vmatpush1.msra.mxu0 %v191
    %209 = vmatprep.subr.mxu0 0.0
    %210 = vmatpush1.msra.mxu0 %v192
    %211 = vmatprep.subr.mxu0 0.0
    %212 = vmatpush1.msra.mxu0 %v193
    %213 = vmatprep.subr.mxu0 0.0
    %214 = vmatpush1.msra.mxu0 %v194
    %215 = vmatprep.subr.mxu0 0.0
    %216 = vmatpush1.msra.mxu0 %v195
    %217 = vmatprep.subr.mxu0 0.0
    %218 = vmatpush1.msra.mxu0 %v196
    %219 = vmatprep.subr.mxu0 0.0
    %220 = vmatpush1.msra.mxu0 %v197
    %221 = vmatprep.subr.mxu0 0.0
    %222 = vmatpush1.msra.mxu0 %v198
    %223 = vmatprep.subr.mxu0 0.0
    %224 = vmatpush1.msra.mxu0 %v199
    %225 = vmatprep.subr.mxu0 0.0
    %226 = vmatpush1.msra.mxu0 %v200
    %227 = vmatprep.subr.mxu0 0.0
    %228 = vmatpush1.msra.mxu0 %v201
    %229 = vmatprep.subr.mxu0 0.0
    %230 = vmatpush1.msra.mxu0 %v202
    %231 = vmatprep.subr.mxu0 0.0
    %232 = vmatpush1.msra.mxu0 %v203
    %233 = vmatprep.subr.mxu0 0.0
    %234 = vmatpush1.msra.mxu0 %v204
    %235 = vmatprep.subr.mxu0 0.0
    %236 = vmatpush1.msra.mxu0 %v205
    %237 = vmatprep.subr.mxu0 0.0
    %238 = vmatpush1.msra.mxu0 %v206
    %239 = vmatprep.subr.mxu0 0.0
    %240 = vmatpush1.msra.mxu0 0.0
    %241 = vmatprep.subr.mxu0 0.0
    %242 = vmatpush1.msra.mxu0 0.0
    %243 = vmatprep.subr.mxu0 0.0
    %244 = vmatpush1.msra.mxu0 0.0
    %245 = vmatprep.subr.mxu0 0.0
    %246 = vmatpush1.msra.mxu0 0.0
    %247 = vmatprep.subr.mxu0 0.0
    %248 = vmatpush1.msra.mxu0 0.0
    %249 = vmatprep.subr.mxu0 0.0
    %250 = vmatpush1.msra.mxu0 0.0
    %251 = vmatprep.subr.mxu0 0.0
    %252 = vmatpush1.msra.mxu0 0.0
    %253 = vmatprep.subr.mxu0 0.0
    %254 = vmatpush1.msra.mxu0 0.0
    %255 = vmatprep.subr.mxu0 0.0
    %256 = vmatpush1.msra.mxu0 0.0
    %257 = vmatprep.subr.mxu0 0.0
    %258 = vmatpush1.msra.mxu0 0.0
    %259 = vmatprep.subr.mxu0 0.0
    %260 = vmatpush1.msra.mxu0 0.0
    %261 = vmatprep.subr.mxu0 0.0
    %262 = vmatpush1.msra.mxu0 0.0
    %263 = vmatprep.subr.mxu0 0.0
    %264 = vmatpush1.msra.mxu0 0.0
    %265 = vmatprep.subr.mxu0 0.0
    %266 = vmatpush1.msra.mxu0 0.0
    %267 = vmatprep.subr.mxu0 0.0
    %268 = vmatpush1.msra.mxu0 0.0
    %269 = vmatprep.subr.mxu0 0.0
    %270 = vmatpush1.msra.mxu0 0.0
    %271 = vmatprep.mubr.f32.mxu0 0.0
    %272 = vmatmul.mubr.f32.gmra.mrb[0].mxu0 %v187
    %v273 = vpop.f32.mrb[0].mxu0
    %v274 = vadd.f32 0.0, %v273
    %v275 = vpop.f32.mrb[0].mxu0
    %276 = vmatprep.mubr.f32.mxu0 0.0
    %277 = vmatmul.mubr.f32.gmra.mrb[0].mxu0 %v188
    %v278 = vpop.f32.mrb[0].mxu0
    %v279 = vadd.f32 0.0, %v278
    %v280 = vpop.f32.mrb[0].mxu0
    %281 = vdwg.mxu0
    %v282 = vadd.f32 %v189, %v274
    %v283 = vadd.f32 %v190, %v279
    %284 = vst [vmem:[#allocation2] sm:$0xff] %v282
    %285 = vst [vmem:[#allocation2 + $0x8] sm:$0xff] %v283
    %p286 = scmp.lt.s32.totalorder 0, 1
    // Predicated region
    $region46: #{rwkv_channel_mix.1} parent=1 // pred_check
      %p287 = pneg %p286
    $region47: #{rwkv_channel_mix.1} parent=1 // pred_check_branch
      %289 = sbr.rel (%p287) target = $region49
    $region48: #{rwkv_channel_mix.1} parent=1 // pred_region
      %v290 = vld [vmem:[%s0] sm:$0xff]
      %v291 = vld [vmem:[%s0 + $0x8] sm:$0xff]
      %v292 = vld [vmem:[%s1] sm:$0xff]
      %v293 = vld [vmem:[%s1 + $0x8] sm:$0xff]
      %v294 = vld [vmem:[%s3] sm:$0x1]
      %v295 = vsub.f32 %v290, %v292
      %v296 = vsub.f32 %v291, %v293
      %v298 = vlaneseq
      %v299 = vshrl.u32 %v298, 7
      %v300 = vsub.s32 0, %v299
      %v301 = vrot.slane %v294, %v300
      %v303 = vmul.f32 %v301, %v295
      %v304 = vmul.f32 %v301, %v296
      %v305 = vadd.f32 %v292, %v303
      %v306 = vadd.f32 %v293, %v304
      %v307 = vld [vmem:[#allocation7] sm:$0xff]
      %v308 = vld [vmem:[#allocation7 + $0x8] sm:$0xff]
      %v309 = vld [vmem:[#allocation7 + $0x10] sm:$0xff]
      %v310 = vld [vmem:[#allocation7 + $0x18] sm:$0xff]
      %v311 = vld [vmem:[#allocation7 + $0x20] sm:$0xff]
      %v312 = vld [vmem:[#allocation7 + $0x28] sm:$0xff]
      %v313 = vld [vmem:[#allocation7 + $0x30] sm:$0xff]
      %v314 = vld [vmem:[#allocation7 + $0x38] sm:$0xff]
      %v315 = vld [vmem:[#allocation7 + $0x40] sm:$0xff]
      %v316 = vld [vmem:[#allocation7 + $0x48] sm:$0xff]
      %v317 = vld [vmem:[#allocation7 + $0x50] sm:$0xff]
      %v318 = vld [vmem:[#allocation7 + $0x58] sm:$0xff]
      %v319 = vld [vmem:[#allocation7 + $0x60] sm:$0xff]
      %v320 = vld [vmem:[#allocation7 + $0x68] sm:$0xff]
      %v321 = vld [vmem:[#allocation7 + $0x70] sm:$0xff]
      %v322 = vld [vmem:[#allocation7 + $0x78] sm:$0xff]
      %323 = vmatprep.subr.mxu0 0.0
      %324 = vmatpush1.msra.mxu0 %v307
      %325 = vmatprep.subr.mxu0 0.0
      %326 = vmatpush1.msra.mxu0 %v308
      %327 = vmatprep.subr.mxu0 0.0
      %328 = vmatpush1.msra.mxu0 %v309
      %329 = vmatprep.subr.mxu0 0.0
      %330 = vmatpush1.msra.mxu0 %v310
      %331 = vmatprep.subr.mxu0 0.0
      %332 = vmatpush1.msra.mxu0 %v311
      %333 = vmatprep.subr.mxu0 0.0
      %334 = vmatpush1.msra.mxu0 %v312
      %335 = vmatprep.subr.mxu0 0.0
      %336 = vmatpush1.msra.mxu0 %v313
      %337 = vmatprep.subr.mxu0 0.0
      %338 = vmatpush1.msra.mxu0 %v314
      %339 = vmatprep.subr.mxu0 0.0
      %340 = vmatpush1.msra.mxu0 %v315
      %341 = vmatprep.subr.mxu0 0.0
      %342 = vmatpush1.msra.mxu0 %v316
      %343 = vmatprep.subr.mxu0 0.0
      %344 = vmatpush1.msra.mxu0 %v317
      %345 = vmatprep.subr.mxu0 0.0
      %346 = vmatpush1.msra.mxu0 %v318
      %347 = vmatprep.subr.mxu0 0.0
      %348 = vmatpush1.msra.mxu0 %v319
      %349 = vmatprep.subr.mxu0 0.0
      %350 = vmatpush1.msra.mxu0 %v320
      %351 = vmatprep.subr.mxu0 0.0
      %352 = vmatpush1.msra.mxu0 %v321
      %353 = vmatprep.subr.mxu0 0.0
      %354 = vmatpush1.msra.mxu0 %v322
      %355 = vmatprep.subr.mxu0 0.0
      %356 = vmatpush1.msra.mxu0 0.0
      %357 = vmatprep.subr.mxu0 0.0
      %358 = vmatpush1.msra.mxu0 0.0
      %359 = vmatprep.subr.mxu0 0.0
      %360 = vmatpush1.msra.mxu0 0.0
      %361 = vmatprep.subr.mxu0 0.0
      %362 = vmatpush1.msra.mxu0 0.0
      %363 = vmatprep.subr.mxu0 0.0
      %364 = vmatpush1.msra.mxu0 0.0
      %365 = vmatprep.subr.mxu0 0.0
      %366 = vmatpush1.msra.mxu0 0.0
      %367 = vmatprep.subr.mxu0 0.0
      %368 = vmatpush1.msra.mxu0 0.0
      %369 = vmatprep.subr.mxu0 0.0
      %370 = vmatpush1.msra.mxu0 0.0
      %371 = vmatprep.subr.mxu0 0.0
      %372 = vmatpush1.msra.mxu0 0.0
      %373 = vmatprep.subr.mxu0 0.0
      %374 = vmatpush1.msra.mxu0 0.0
      %375 = vmatprep.subr.mxu0 0.0
      %376 = vmatpush1.msra.mxu0 0.0
      %377 = vmatprep.subr.mxu0 0.0
      %378 = vmatpush1.msra.mxu0 0.0
      %379 = vmatprep.subr.mxu0 0.0
      %380 = vmatpush1.msra.mxu0 0.0
      %381 = vmatprep.subr.mxu0 0.0
      %382 = vmatpush1.msra.mxu0 0.0
      %383 = vmatprep.subr.mxu0 0.0
      %384 = vmatpush1.msra.mxu0 0.0
      %385 = vmatprep.subr.mxu0 0.0
      %386 = vmatpush1.msra.mxu0 0.0
      %387 = vmatprep.mubr.f32.mxu0 0.0
      %388 = vmatmul.mubr.f32.gmra.mrb[0].mxu0 %v305
      %v389 = vpop.f32.mrb[0].mxu0
      %v390 = vadd.f32 0.0, %v389
      %v391 = vpop.f32.mrb[0].mxu0
      %392 = vmatprep.mubr.f32.mxu0 0.0
      %393 = vmatmul.mubr.f32.gmra.mrb[0].mxu0 %v306
      %v394 = vpop.f32.mrb[0].mxu0
      %v395 = vadd.f32 0.0, %v394
      %v396 = vpop.f32.mrb[0].mxu0
      %397 = vdwg.mxu0
      %v398 = vxor.u32 %v390, 2147483648
      %v399 = vxor.u32 %v395, 2147483648
      %v400 = vmul.f32 %v398, 1.442695
      %v401 = vpow.pop %v400
      %v402 = vmul.f32 %v399, 1.442695
      %v403 = vpow.pop %v402
      %v404 = vadd.f32 %v401, 1.0
      %v405 = vadd.f32 %v403, 1.0
      %v406 = vrcp.pop %v404
      %v407 = vmul.f32 1.0, %v406
      %v408 = vrcp.pop %v405
      %v409 = vmul.f32 1.0, %v408
      %s410 = smul.u32 0, 16
      %s411 = scalar_lea.vmem [#allocation3], %s410
      %412 = vst [vmem:[%s411] sm:$0xff] %v407
      %413 = vst [vmem:[%s411 + $0x8] sm:$0xff] %v409
    $region49: #{rwkv_channel_mix.1} parent=1 // pred_fallthru
      _
    // Predicated region
    $region50: #{rwkv_channel_mix.1} parent=1 // pred_check
      %p414 = pneg %p67
    $region51: #{rwkv_channel_mix.1} parent=1 // pred_check_branch
      %416 = sbr.rel (%p414) target = $region53
    $region52: #{rwkv_channel_mix.1} parent=1 // pred_region
      %v417 = vld [vmem:[#allocation3] sm:$0xff]
      %v418 = vld [vmem:[#allocation3 + $0x8] sm:$0xff]
      %v419 = vld [vmem:[#allocation2] sm:$0xff]
      %v420 = vld [vmem:[#allocation2 + $0x8] sm:$0xff]
      %v421 = vmul.f32 %v417, %v419
      %v422 = vmul.f32 %v418, %v420
      %423 = vst [vmem:[%s7] sm:$0xff] %v421
      %424 = vst [vmem:[%s7 + $0x8] sm:$0xff] %v422
    $region53: #{rwkv_channel_mix.1} parent=1 // pred_fallthru
      _
    // Predicated region
    $region54: #{rwkv_channel_mix.1} parent=1 // pred_check
      _
    $region55: #{rwkv_channel_mix.1} parent=1 // pred_check_branch
      %426 = sbr.rel (0) target = $region57
    $region56: #{rwkv_channel_mix.1} parent=1 // pred_region
      _
    $region57: #{rwkv_channel_mix.1} parent=1 // pred_fallthru
      _
    // Predicated region
    $region58: #{rwkv_channel_mix.1} parent=1 // pred_check
      _
    $region59: #{rwkv_channel_mix.1} parent=1 // pred_check_branch
      %428 = sbr.rel (0) target = $region61
    $region60: #{rwkv_channel_mix.1} parent=1 // pred_region
      _
    $region61: #{rwkv_channel_mix.1} parent=1 // pred_fallthru
      _
    %429 = vsyncpa [#allocation6], 1
    %430 = vsyncpa [#allocation8], 1

</llo_original>
